<compile_context>
chip_gen: v5e
topology: v5e:2x2
jax: 0.10.0
libtpu: 0.0.40
codegen_flags: <defaults>
</compile_context>

<pallas_src>
import functools
import math

import jax
import jax.numpy as jnp
from jax.experimental import pallas as pl
from jax.experimental.pallas import tpu as pltpu

NHEAD = 8
LN_EPS = 1e-5


# --------------------------------------------------------------------------
# Linear:  y = x @ Wt + b   (+ optional ReLU), tiled over (M, N) on the MXU.
# --------------------------------------------------------------------------
def _linear_kernel(x_ref, wt_ref, b_ref, o_ref, *, relu):
    acc = jnp.dot(x_ref[...], wt_ref[...], preferred_element_type=jnp.float32)
    acc = acc + b_ref[...]                       # (1, tn) broadcast over rows
    if relu:
        acc = jnp.maximum(acc, 0.0)
    o_ref[...] = acc


def linear(x, w_t, b, *, relu=False, tile_m=256, tile_n=256):
    """x: (M, K) f32, w_t: (K, N) f32 (already transposed), b: (N,) f32."""
    M, K = x.shape
    K2, N = w_t.shape
    assert K == K2
    tm = M if M <= tile_m else tile_m
    tn = N if N <= tile_n else tile_n
    # TODO(synk): for K much larger than 2048 add a K grid axis + VMEM accumulator.
    grid = (pl.cdiv(M, tm), pl.cdiv(N, tn))
    return pl.pallas_call(
        functools.partial(_linear_kernel, relu=relu),
        out_shape=jax.ShapeDtypeStruct((M, N), jnp.float32),
        grid=grid,
        in_specs=[
            pl.BlockSpec((tm, K), lambda i, j: (i, 0)),
            pl.BlockSpec((K, tn), lambda i, j: (0, j)),
            pl.BlockSpec((1, tn), lambda i, j: (0, j)),
        ],
        out_specs=pl.BlockSpec((tm, tn), lambda i, j: (i, j)),
        compiler_params=pltpu.CompilerParams(
            dimension_semantics=("parallel", "parallel")),
    )(x, w_t, b.reshape(1, N))


# --------------------------------------------------------------------------
# Multi-head attention core: one grid step per batch element, all heads
# batched inside the kernel (einsum -> MXU), softmax on VPU/EUP/XLU.
# --------------------------------------------------------------------------
def _mha_kernel(q_ref, k_ref, v_ref, bias_ref, o_ref, *, scale):
    q = q_ref[0]                                  # (H, S, hd)
    k = k_ref[0]
    v = v_ref[0]
    s = jnp.einsum("hqd,hkd->hqk", q, k,
                   preferred_element_type=jnp.float32) * scale   # (H, S, S)
    s = s + bias_ref[...]                         # (1, S) key-padding bias
    m = jnp.max(s, axis=-1, keepdims=True)
    p = jnp.exp(s - m)
    denom = jnp.sum(p, axis=-1, keepdims=True)
    o_ref[0] = jnp.einsum("hqk,hkd->hqd", p / denom, v,
                          preferred_element_type=jnp.float32)


def mha(q, k, v, mask_bias):
    """q/k/v: (B, H, S, hd) f32, mask_bias: (B, S) f32 (0 or -1e9)."""
    B, H, S, hd = q.shape
    scale = 1.0 / math.sqrt(hd)
    qkv_spec = pl.BlockSpec((1, H, S, hd), lambda b: (b, 0, 0, 0))
    return pl.pallas_call(
        functools.partial(_mha_kernel, scale=scale),
        out_shape=jax.ShapeDtypeStruct((B, H, S, hd), jnp.float32),
        grid=(B,),
        in_specs=[qkv_spec, qkv_spec, qkv_spec,
                  pl.BlockSpec((1, S), lambda b: (b, 0))],
        out_specs=pl.BlockSpec((1, H, S, hd), lambda b: (b, 0, 0, 0)),
        compiler_params=pltpu.CompilerParams(dimension_semantics=("parallel",)),
    )(q, k, v, mask_bias)


# --------------------------------------------------------------------------
# Residual add + LayerNorm over the last dim, tiled over rows.
# --------------------------------------------------------------------------
def _add_ln_kernel(x_ref, res_ref, g_ref, b_ref, o_ref, *, eps):
    y = x_ref[...] + res_ref[...]
    mean = jnp.mean(y, axis=-1, keepdims=True)
    yc = y - mean
    var = jnp.mean(yc * yc, axis=-1, keepdims=True)
    inv = jax.lax.rsqrt(var + eps)
    o_ref[...] = yc * inv * g_ref[...] + b_ref[...]


def add_layernorm(x, res, gamma, beta, *, eps=LN_EPS, tile_m=1024):
    M, D = x.shape
    tm = M if M <= tile_m else tile_m
    return pl.pallas_call(
        functools.partial(_add_ln_kernel, eps=eps),
        out_shape=jax.ShapeDtypeStruct((M, D), jnp.float32),
        grid=(pl.cdiv(M, tm),),
        in_specs=[
            pl.BlockSpec((tm, D), lambda i: (i, 0)),
            pl.BlockSpec((tm, D), lambda i: (i, 0)),
            pl.BlockSpec((1, D), lambda i: (0, 0)),
            pl.BlockSpec((1, D), lambda i: (0, 0)),
        ],
        out_specs=pl.BlockSpec((tm, D), lambda i: (i, 0)),
        compiler_params=pltpu.CompilerParams(dimension_semantics=("parallel",)),
    )(x, res, gamma.reshape(1, D), beta.reshape(1, D))


# --------------------------------------------------------------------------
# One post-norm encoder layer (PyTorch default norm_first=False, ReLU FFN).
# Dropout(p=0.1) is an inference-mode no-op.
# --------------------------------------------------------------------------
def encoder_layer_forward(x, p, mask_bias):
    B, S, D = x.shape
    H = NHEAD
    hd = D // H
    x2 = x.reshape(B * S, D)                      # lane-dense token slab

    # --- self attention ---
    qkv = linear(x2, p["in_proj_wt"], p["in_proj_b"])           # (B*S, 3D)
    q, k, v = jnp.split(qkv, 3, axis=-1)

    def to_heads(t):
        return t.reshape(B, S, H, hd).transpose(0, 2, 1, 3)     # (B,H,S,hd)

    attn = mha(to_heads(q), to_heads(k), to_heads(v), mask_bias)
    attn = attn.transpose(0, 2, 1, 3).reshape(B * S, D)
    attn = linear(attn, p["out_proj_wt"], p["out_proj_b"])
    # TODO(synk): training-mode dropout (p=0.1) not implemented (inference path).
    x2 = add_layernorm(attn, x2, p["ln1_g"], p["ln1_b"])

    # --- feed forward ---
    ff = linear(x2, p["lin1_wt"], p["lin1_b"], relu=True)       # (B*S, 2048)
    ff = linear(ff, p["lin2_wt"], p["lin2_b"])                  # (B*S, D)
    x2 = add_layernorm(ff, x2, p["ln2_g"], p["ln2_b"])
    return x2.reshape(B, S, D)


def dummy_transformer_encoder(src, params_list, pos=None, src_key_padding_mask=None):
    """Mirrors DummyTransformerEncoder.forward (inference)."""
    B, S, D = src.shape
    if pos is not None:
        if pos.shape[0] == 1:
            pos = jnp.broadcast_to(pos, (B,) + pos.shape[1:])
        elif pos.shape[1] == 1:
            pos = jnp.broadcast_to(pos, (pos.shape[0], S, pos.shape[2]))
        src = src + pos                           # trivial broadcast add (wrapper)
    if src_key_padding_mask is not None:
        if src_key_padding_mask.shape[0] != B:
            src_key_padding_mask = src_key_padding_mask.T
        mask_bias = jnp.where(src_key_padding_mask, -1e9, 0.0).astype(jnp.float32)
    else:
        mask_bias = jnp.zeros((B, S), dtype=jnp.float32)

    x = src.astype(jnp.float32)
    for p in params_list:
        x = encoder_layer_forward(x, p, mask_bias)
    return x


# --------------------------------------------------------------------------
# Pure-JAX reference (same math) for a correctness check.
# --------------------------------------------------------------------------
def _ref_ln(y, g, b):
    m = y.mean(-1, keepdims=True)
    yc = y - m
    var = (yc * yc).mean(-1, keepdims=True)
    return yc * jax.lax.rsqrt(var + LN_EPS) * g + b


def _ref_layer(x, p, mask_bias):
    B, S, D = x.shape
    H = NHEAD
    hd = D // H
    x2 = x.reshape(B * S, D)
    qkv = x2 @ p["in_proj_wt"] + p["in_proj_b"]
    q, k, v = jnp.split(qkv, 3, axis=-1)
    q = q.reshape(B, S, H, hd).transpose(0, 2, 1, 3)
    k = k.reshape(B, S, H, hd).transpose(0, 2, 1, 3)
    v = v.reshape(B, S, H, hd).transpose(0, 2, 1, 3)
    s = jnp.einsum("bhqd,bhkd->bhqk", q, k) / math.sqrt(hd)
    s = s + mask_bias[:, None, None, :]
    a = jax.nn.softmax(s, axis=-1)
    attn = jnp.einsum("bhqk,bhkd->bhqd", a, v).transpose(0, 2, 1, 3).reshape(B * S, D)
    attn = attn @ p["out_proj_wt"] + p["out_proj_b"]
    x2 = _ref_ln(attn + x2, p["ln1_g"], p["ln1_b"])
    ff = jnp.maximum(x2 @ p["lin1_wt"] + p["lin1_b"], 0.0)
    ff = ff @ p["lin2_wt"] + p["lin2_b"]
    x2 = _ref_ln(ff + x2, p["ln2_g"], p["ln2_b"])
    return x2.reshape(B, S, D)


def _ref_forward(src, params_list, pos=None, src_key_padding_mask=None):
    B, S, D = src.shape
    if pos is not None:
        if pos.shape[0] == 1:
            pos = jnp.broadcast_to(pos, (B,) + pos.shape[1:])
        elif pos.shape[1] == 1:
            pos = jnp.broadcast_to(pos, (pos.shape[0], S, pos.shape[2]))
        src = src + pos
    if src_key_padding_mask is not None:
        if src_key_padding_mask.shape[0] != B:
            src_key_padding_mask = src_key_padding_mask.T
        mask_bias = jnp.where(src_key_padding_mask, -1e9, 0.0).astype(jnp.float32)
    else:
        mask_bias = jnp.zeros((B, S), dtype=jnp.float32)
    x = src.astype(jnp.float32)
    for p in params_list:
        x = _ref_layer(x, p, mask_bias)
    return x


if __name__ == "__main__":
    D = 32            # d_model (divisible by nhead=8)
    DFF = 2048        # dim_feedforward fixed by the module spec
    NUM_LAYERS = 2
    B, S = 2, 8

    key = jax.random.PRNGKey(0)
    keys = iter(jax.random.split(key, 64))

    def _w(shape, scale=0.05):
        return jax.random.normal(next(keys), shape, dtype=jnp.float32) * scale

    def init_layer():
        return {
            "in_proj_wt": _w((D, 3 * D)),     # (in, out) = W^T layout
            "in_proj_b": _w((3 * D,)),
            "out_proj_wt": _w((D, D)),
            "out_proj_b": _w((D,)),
            "lin1_wt": _w((D, DFF)),
            "lin1_b": _w((DFF,)),
            "lin2_wt": _w((DFF, D)),
            "lin2_b": _w((D,)),
            "ln1_g": jnp.ones((D,), jnp.float32),
            "ln1_b": jnp.zeros((D,), jnp.float32),
            "ln2_g": jnp.ones((D,), jnp.float32),
            "ln2_b": jnp.zeros((D,), jnp.float32),
        }

    params = [init_layer() for _ in range(NUM_LAYERS)]

    src = jax.random.normal(next(keys), (B, S, D), dtype=jnp.float32)
    pos = jax.random.normal(next(keys), (1, S, D), dtype=jnp.float32) * 0.1
    pad_mask = jnp.zeros((B, S), dtype=bool).at[1, S - 2:].set(True)

    out = dummy_transformer_encoder(src, params, pos=pos,
                                    src_key_padding_mask=pad_mask)
    out = jax.block_until_ready(out)

    ref = _ref_forward(src, params, pos=pos, src_key_padding_mask=pad_mask)
    assert out.shape == (B, S, D)
    assert bool(jnp.all(jnp.isfinite(out)))
    assert jnp.allclose(out, ref, atol=1e-2, rtol=1e-2), float(
        jnp.max(jnp.abs(out - ref)))

    print("KERNEL_OK")
</pallas_src>

<mosaic_0001>
module attributes {stable_mosaic.version = 11 : i64} {
  func.func @_linear_kernel(%arg0: i32, %arg1: i32, %arg2: memref<16x32xf32, #tpu.memory_space<vmem>>, %arg3: memref<32x96xf32, #tpu.memory_space<vmem>>, %arg4: memref<1x96xf32, #tpu.memory_space<vmem>>, %arg5: memref<16x96xf32, #tpu.memory_space<vmem>>) attributes {dimension_semantics = [#tpu.dimension_semantics<parallel>, #tpu.dimension_semantics<parallel>], iteration_bounds = array<i64: 1, 1>, scalar_prefetch = 0 : i64, scratch_operands = 0 : i64, tpu.core_type = #tpu.core_type<tc>, window_params = [{transform_indices = @transform_0, window_bounds = array<i64: 16, 32>}, {transform_indices = @transform_1, window_bounds = array<i64: 32, 96>}, {transform_indices = @transform_2, window_bounds = array<i64: 1, 96>}, {transform_indices = @transform_3, window_bounds = array<i64: 16, 96>}]} {
    %c0 = arith.constant 0 : index
    %c0_0 = arith.constant 0 : index
    %0 = vector.load %arg2[%c0, %c0_0] : memref<16x32xf32, #tpu.memory_space<vmem>>, vector<16x32xf32>
    %c0_1 = arith.constant 0 : index
    %c0_2 = arith.constant 0 : index
    %1 = vector.load %arg3[%c0_1, %c0_2] : memref<32x96xf32, #tpu.memory_space<vmem>>, vector<32x96xf32>
    %cst = arith.constant dense<0.000000e+00> : vector<16x96xf32>
    %2 = tpu.matmul %0, %1, %cst {dimension_numbers = #tpu.dot_dimension_numbers<[1], [0], [0], [1], [0, 0, 1, 1], [], []>} : vector<16x32xf32>, vector<32x96xf32>, vector<16x96xf32> -> vector<16x96xf32>
    %c0_3 = arith.constant 0 : index
    %c0_4 = arith.constant 0 : index
    %3 = vector.load %arg4[%c0_3, %c0_4] : memref<1x96xf32, #tpu.memory_space<vmem>>, vector<1x96xf32>
    %4 = vector.broadcast %3 : vector<1x96xf32> to vector<16x96xf32>
    %5 = arith.addf %2, %4 : vector<16x96xf32>
    %c0_5 = arith.constant 0 : index
    %c0_6 = arith.constant 0 : index
    %6 = vector.load %arg5[%c0_5, %c0_6] : memref<16x96xf32, #tpu.memory_space<vmem>>, vector<16x96xf32>
    tpu.vector_store %arg5[%c0_5, %c0_6], %5 {strides = array<i32>} : memref<16x96xf32, #tpu.memory_space<vmem>>, vector<16x96xf32>,
    return
  }
  func.func @transform_0(%arg0: i32, %arg1: i32) -> (i32, i32) {
    %c0_i32 = arith.constant 0 : i32
    %c0_i32_0 = arith.constant 0 : i32
    return %arg0, %c0_i32 : i32, i32
  }
  func.func @transform_1(%arg0: i32, %arg1: i32) -> (i32, i32) {
    %c0_i32 = arith.constant 0 : i32
    %c0_i32_0 = arith.constant 0 : i32
    return %c0_i32, %arg1 : i32, i32
  }
  func.func @transform_2(%arg0: i32, %arg1: i32) -> (i32, i32) {
    %c0_i32 = arith.constant 0 : i32
    %c0_i32_0 = arith.constant 0 : i32
    return %c0_i32, %arg1 : i32, i32
  }
  func.func @transform_3(%arg0: i32, %arg1: i32) -> (i32, i32) {
    %c0_i32 = arith.constant 0 : i32
    return %arg0, %arg1 : i32, i32
  }
}

</mosaic_0001>

<llo_original>
// kernel: tpu_custom_call.1
$region0: #{tpu_custom_call.1}
  #allocation0 [shape = 'u32[]', space=smem, size = 0x4, offset = 0x4, fixed_abs, tag = 'smem constant byte address 0x4 - core index']
  #allocation1 [shape = 'u32[72,128]{1,0:T(1,128)}', space=vmem, size = 0x9000, scoped, tag = 'internal scratch']
  %s0 = inlined_call_operand.hbm [shape: f32[16,32], index: 0, kind: input, shape index: {}]
  %s1 = inlined_call_operand.hbm [shape: f32[32,96], index: 1, kind: input, shape index: {}]
  %s2 = inlined_call_operand.vmem [shape: f32[1,96], index: 2, kind: input, shape index: {}]
  %s3 = inlined_call_operand.hbm [shape: f32[16,96], index: 3, kind: output, shape index: {}]
  %s4 = sld [smem:[#allocation0]]
  $region30: #{tpu_custom_call.1} parent=0
    _
  %s6 = ssub.s32 1, %s4
  %s7 = scalar_select 0, %s6, %s4
  $region1: #{tpu_custom_call.1} parent=0
    #allocation2 [shape = 'u8[8192]{0}', space=vmem, size = 0x2000, scoped, tag = 'input window, operand 0, single buffered']
    #allocation3 [shape = 's32[1]{0}', space=sflag, size = 0x4, scoped, tag = 'scoped memory for tpu_custom_call.1']
    #allocation4 [shape = 's32[1]{0}', space=sflag, size = 0x4, scoped, tag = 'scoped memory for tpu_custom_call.1']
    #allocation5 [shape = 'u8[16384]{0}', space=vmem, size = 0x4000, scoped, tag = 'input window, operand 1, single buffered']
    #allocation6 [shape = 's32[1]{0}', space=sflag, size = 0x4, scoped, tag = 'scoped memory for tpu_custom_call.1']
    #allocation7 [shape = 'u8[8192]{0}', space=vmem, size = 0x2000, scoped, tag = 'output window, operand 0, single buffered']
    %8 = vsyncpa [#allocation3], 0
    %9 = vsyncpa [#allocation6], 0
    %10 = vsyncpa [#allocation4], 0
    // Predicated region
    $region2: #{tpu_custom_call.1} parent=1 // pred_check
      _
    $region3: #{tpu_custom_call.1} parent=1 // pred_check_branch
      %12 = sbr.rel (0) target = $region5
    $region4: #{tpu_custom_call.1} parent=1 // pred_region
      %14 = vsyncadd [#allocation3], 0
      %s15 = sshll.u32 %s0, 4
      %s16 = int_to_ptr.hbm [resolvable:$true] %s15
      %s17 = sshll.u32 [#allocation2], 4
      %s18 = int_to_ptr.vmem [resolvable:$true] %s17
      %23 = dma.hbm_to_vmem [thread:$0]  %s16, 256, %s18, [#allocation3], 128, 128, 8
    $region5: #{tpu_custom_call.1} parent=1 // pred_fallthru
      _
    // Predicated region
    $region6: #{tpu_custom_call.1} parent=1 // pred_check
      _
    $region7: #{tpu_custom_call.1} parent=1 // pred_check_branch
      %25 = sbr.rel (0) target = $region9
    $region8: #{tpu_custom_call.1} parent=1 // pred_region
      %27 = vsyncadd [#allocation6], 0
      %s28 = sshll.u32 %s1, 4
      %s29 = int_to_ptr.hbm [resolvable:$true] %s28
      %s30 = sshll.u32 [#allocation5], 4
      %s31 = int_to_ptr.vmem [resolvable:$true] %s30
      %36 = dma.hbm_to_vmem [thread:$0]  %s29, 512, %s31, [#allocation6], 128, 128, 8
    $region9: #{tpu_custom_call.1} parent=1 // pred_fallthru
      _
    // Predicated region
    $region10: #{tpu_custom_call.1} parent=1 // pred_check
      _
    $region11: #{tpu_custom_call.1} parent=1 // pred_check_branch
      %38 = sbr.rel (0) target = $region13
    $region12: #{tpu_custom_call.1} parent=1 // pred_region
      _
    $region13: #{tpu_custom_call.1} parent=1 // pred_fallthru
      _
    // Predicated region
    $region14: #{tpu_custom_call.1} parent=1 // pred_check
      _
    $region15: #{tpu_custom_call.1} parent=1 // pred_check_branch
      %40 = sbr.rel (0) target = $region17
    $region16: #{tpu_custom_call.1} parent=1 // pred_region
      %42 = dma.done [#allocation3], 256
    $region17: #{tpu_custom_call.1} parent=1 // pred_fallthru
      _
    // Predicated region
    $region18: #{tpu_custom_call.1} parent=1 // pred_check
      _
    $region19: #{tpu_custom_call.1} parent=1 // pred_check_branch
      %44 = sbr.rel (0) target = $region21
    $region20: #{tpu_custom_call.1} parent=1 // pred_region
      %46 = dma.done [#allocation6], 512
    $region21: #{tpu_custom_call.1} parent=1 // pred_fallthru
      _
    %v47 = vld [vmem:[#allocation2] sm:$0xff]
    %v48 = vld [vmem:[#allocation2 + $0x8] sm:$0xff]
    %v49 = vld [vmem:[#allocation5] sm:$0xff]
    %v50 = vld [vmem:[#allocation5 + $0x8] sm:$0xff]
    %v51 = vld [vmem:[#allocation5 + $0x10] sm:$0xff]
    %v52 = vld [vmem:[#allocation5 + $0x18] sm:$0xff]
    %v53 = vld [vmem:[%s2] sm:$0x1]
    %v55 = vperm.slane %v53, 0
    %vm57 = vcmask 261120
    %v59 = vsel %vm57, %v47, 0
    %v62 = vsel %vm57, %v48, 0
    %64 = vmatpush.msra.mxu0 0.0
    %65 = vmatpush.msra.mxu0 0.0
    %66 = vmatpush.msra.mxu0 0.0
    %67 = vmatpush.msra.mxu0 0.0
    %68 = vmatpush.msra.mxu0 0.0
    %69 = vmatpush.msra.mxu0 0.0
    %70 = vmatpush.msra.mxu0 0.0
    %71 = vmatpush.msra.mxu0 0.0
    %72 = vmatpush.msra.mxu0 0.0
    %73 = vmatpush.msra.mxu0 0.0
    %74 = vmatpush.msra.mxu0 0.0
    %75 = vmatpush.msra.mxu0 0.0
    %76 = vmatpush.msra.mxu0 %v52
    %77 = vmatpush.msra.mxu0 %v51
    %78 = vmatpush.msra.mxu0 %v50
    %79 = vmatpush.msra.mxu0 %v49
    %80 = vmatmul.f32.gmra.mxu0 %v59
    %v81 = vpop.f32.mrf.mxu0
    %v82 = vadd.f32 %v55, %v81
    %83 = vmatmul.f32.gmra.mxu0 %v62
    %v84 = vpop.f32.mrf.mxu0
    %v85 = vadd.f32 %v55, %v84
    %86 = vdwg.mxu0
    %vm87 = vcmask 785408
    %88 = vst.msk [vmem:[#allocation7] sm:$0xff] %vm87, %v82
    %89 = vst.msk [vmem:[#allocation7 + $0x8] sm:$0xff] %vm87, %v85
    // Predicated region
    $region22: #{tpu_custom_call.1} parent=1 // pred_check
      _
    $region23: #{tpu_custom_call.1} parent=1 // pred_check_branch
      %91 = sbr.rel (0) target = $region25
    $region24: #{tpu_custom_call.1} parent=1 // pred_region
      %93 = vsyncadd [#allocation4], 0
      %s94 = sshll.u32 [#allocation7], 4
      %s95 = int_to_ptr.vmem [resolvable:$true] %s94
      %s96 = sshll.u32 %s3, 4
      %s97 = int_to_ptr.hbm [resolvable:$true] %s96
      %102 = dma.vmem_to_hbm [thread:$0]  %s95, 256, %s97, [#allocation4], 128, 128, 8
    $region25: #{tpu_custom_call.1} parent=1 // pred_fallthru
      _
    // Predicated region
    $region26: #{tpu_custom_call.1} parent=1 // pred_check
      _
    $region27: #{tpu_custom_call.1} parent=1 // pred_check_branch
      %104 = sbr.rel (0) target = $region29
    $region28: #{tpu_custom_call.1} parent=1 // pred_region
      %106 = dma.done [#allocation4], 256
    $region29: #{tpu_custom_call.1} parent=1 // pred_fallthru
      _
    %107 = vsyncpa [#allocation3], 1
    %108 = vsyncpa [#allocation6], 1
    %109 = vsyncpa [#allocation4], 1

</llo_original>
